<compile_context>
chip_gen: v6e
topology: v6e:2x2x1
jax: 0.10.0
libtpu: 0.0.40
codegen_flags: <defaults>
</compile_context>

<pallas_src>
import functools

import jax
import jax.numpy as jnp
from jax.experimental import pallas as pl
from jax.experimental.pallas import tpu as pltpu

LANE = 128
_MIB = 1024 * 1024


def _round_up(x, m):
    return (x + m - 1) // m * m


def _vmem_capacity_bytes():
    try:
        return int(pltpu.get_tpu_info().vmem_capacity_bytes)
    except Exception:
        return 64 * _MIB  # v7x-safe fallback


def _choose_tiles(n):
    tile = min(512, _round_up(n, LANE))
    n_pad = _round_up(n, tile)
    tm, tk = tile, tile
    # Keep >= 2 row tiles so both v7x TensorCores get work on the parallel axis.
    if n_pad // tm < 2 and n_pad >= 2 * LANE:
        tm = n_pad // 2  # still a multiple of 64 (>= 8 sublanes), divides n_pad
    return n_pad, tm, tk


# ----------------------------- Pallas kernel --------------------------------
def _gcn_layer_kernel(*refs, apply_relu, project, feat_resident, tk):
    """One grid step of  out = maybe_relu((A_hat @ feat) [@ W] + b).

    Grid = (row_tiles, k_tiles).  adj_ref is a [tm, tk] bf16 tile.  feat is
    either VMEM-resident (full [n_pad, width], sliced with pl.ds) or a streamed
    [tk, width] tile.  The f32 accumulator holds the partial aggregation for
    the current row tile; projection/bias/ReLU run only in the last-K finalize.
    """
    if project:
        adj_ref, feat_ref, w_ref, b_ref, out_ref, acc_ref = refs
    else:
        adj_ref, feat_ref, b_ref, out_ref, acc_ref = refs
        w_ref = None

    k = pl.program_id(1)

    @pl.when(k == 0)
    def _():
        acc_ref[...] = jnp.zeros_like(acc_ref)

    if feat_resident:
        off = pl.multiple_of(k * tk, LANE)
        feat_tile = feat_ref[pl.ds(off, tk), :]
    else:
        feat_tile = feat_ref[...]

    # Dominant term: bf16 x bf16 aggregation, f32 accumulation on the MXU.
    acc_ref[...] += jnp.dot(adj_ref[...], feat_tile,
                            preferred_element_type=jnp.float32)

    @pl.when(k == pl.num_programs(1) - 1)
    def _():
        acc = acc_ref[...]
        if project:
            y = jnp.dot(acc.astype(jnp.bfloat16), w_ref[...],
                        preferred_element_type=jnp.float32) + b_ref[...]
        else:
            y = acc + b_ref[...]
        if apply_relu:
            y = jnp.maximum(y, 0.0)
        out_ref[...] = y.astype(out_ref.dtype)


def _gcn_layer(adj, feat, w, b, *, apply_relu, out_dtype, tm, tk):
    """out = maybe_relu((adj @ feat) [@ w] + b), tiled over (rows, contraction)."""
    n_pad = adj.shape[0]
    width = feat.shape[1]
    c_out = w.shape[1] if w is not None else b.shape[1]
    grid = (n_pad // tm, n_pad // tk)

    # ---- per-generation VMEM budgeting ----
    cap = _vmem_capacity_bytes()
    budget = min(int(cap * 3 // 4), 96 * _MIB)   # ~48 MiB on v7x, <=96 MiB on v5e/v6e
    out_bpe = jnp.dtype(out_dtype).itemsize
    fixed = (2 * tm * tk * 2                     # double-buffered A_hat tiles (bf16)
             + 2 * tm * c_out * out_bpe          # double-buffered output tiles
             + tm * width * 4                    # f32 accumulator scratch
             + (width * c_out * 2 if w is not None else 0)  # resident W (bf16)
             + c_out * 4)                        # bias
    feat_resident = fixed + n_pad * width * 2 <= budget - 8 * _MIB
    feat_bytes = n_pad * width * 2 if feat_resident else 2 * tk * width * 2
    vmem_limit = int(min(budget, max(32 * _MIB, (fixed + feat_bytes) * 3 // 2)))

    in_specs = [pl.BlockSpec((tm, tk), lambda i, k: (i, k))]          # A_hat tile
    args = [adj, feat]
    if feat_resident:
        in_specs.append(pl.BlockSpec((n_pad, width), lambda i, k: (0, 0)))  # resident feat
    else:
        in_specs.append(pl.BlockSpec((tk, width), lambda i, k: (k, 0)))     # streamed feat
    if w is not None:
        in_specs.append(pl.BlockSpec((width, c_out), lambda i, k: (0, 0)))  # W (resident)
        args.append(w)
    in_specs.append(pl.BlockSpec((1, c_out), lambda i, k: (0, 0)))          # bias
    args.append(b)

    kernel = functools.partial(_gcn_layer_kernel, apply_relu=apply_relu,
                               project=w is not None,
                               feat_resident=feat_resident, tk=tk)
    return pl.pallas_call(
        kernel,
        out_shape=jax.ShapeDtypeStruct((n_pad, c_out), out_dtype),
        grid_spec=pltpu.PrefetchScalarGridSpec(
            num_scalar_prefetch=0,
            grid=grid,
            in_specs=in_specs,
            out_specs=pl.BlockSpec((tm, c_out), lambda i, k: (i, 0)),
            scratch_shapes=[pltpu.VMEM((tm, width), jnp.float32)],
        ),
        compiler_params=pltpu.CompilerParams(
            dimension_semantics=("parallel", "arbitrary"),
            vmem_limit_bytes=vmem_limit,
        ),
    )(*args)


# ------------------------------- wrapper -------------------------------------
def gcn_forward(x, edge_index, w1, b1, w2, b2):
    n, c_in = x.shape
    hidden = w1.shape[1]
    c_out = w2.shape[1]

    n_pad, tm, tk = _choose_tiles(n)
    c_in_pad = _round_up(c_in, LANE)
    hid_pad = _round_up(hidden, LANE)
    c_out_pad = _round_up(c_out, LANE)

    # A_hat built directly at padded size in bf16 (no extra pad+cast pass).
    adj_p = build_normalized_adjacency(edge_index, n, n_pad=n_pad,
                                       dtype=jnp.bfloat16)

    b1_p = jnp.zeros((1, hid_pad), jnp.float32).at[:, :hidden].set(b1)
    b2_p = jnp.zeros((1, c_out_pad), jnp.float32).at[:, :c_out].set(b2)
    w2_p = jnp.zeros((hid_pad, c_out_pad), jnp.bfloat16
                     ).at[:hidden, :c_out].set(w2.astype(jnp.bfloat16))

    # Width-aware layer-1 association: stream the narrower of X / X@W1.
    if hid_pad < c_in_pad:
        xw1 = (x @ w1).astype(jnp.bfloat16)          # tiny pre-projection
        feat1 = jnp.zeros((n_pad, hid_pad), jnp.bfloat16
                          ).at[:n, :hidden].set(xw1)
        w1_arg = None                                # kernel does A@feat + b, relu
    else:
        feat1 = jnp.zeros((n_pad, c_in_pad), jnp.bfloat16
                          ).at[:n, :c_in].set(x.astype(jnp.bfloat16))
        w1_arg = jnp.zeros((c_in_pad, hid_pad), jnp.bfloat16
                           ).at[:c_in, :hidden].set(w1.astype(jnp.bfloat16))

    # Layer 1: h = relu(A_hat-aggregate @ W1 + b1)  (bf16 h feeds layer 2)
    h_p = _gcn_layer(adj_p, feat1, w1_arg, b1_p, apply_relu=True,
                     out_dtype=jnp.bfloat16, tm=tm, tk=tk)
    # Layer 2: out = (A_hat @ h) @ W2 + b2
    out_p = _gcn_layer(adj_p, h_p, w2_p, b2_p, apply_relu=False,
                       out_dtype=jnp.float32, tm=tm, tk=tk)
    return out_p[:n, :c_out]


# ------------------------------- JAX glue ------------------------------------
def build_normalized_adjacency(edge_index, num_nodes, *, n_pad=None,
                               dtype=jnp.float32):
    """Dense A_hat = D^{-1/2} (A + remaining self loops) D^{-1/2}, optionally padded."""
    if n_pad is None:
        n_pad = num_nodes
    src, dst = edge_index[0], edge_index[1]
    adj = jnp.zeros((n_pad, n_pad), jnp.float32)
    adj = adj.at[dst, src].add(1.0)                  # edge j -> i stored at [i, j]
    idx = jnp.arange(num_nodes)
    diag = adj[idx, idx]
    # add_remaining_self_loops semantics: only add a self loop where none exists.
    adj = adj.at[idx, idx].set(jnp.where(diag > 0.0, diag, 1.0))
    deg = adj.sum(axis=1)
    dinv = jnp.where(deg > 0, jax.lax.rsqrt(deg), 0.0)
    return (dinv[:, None] * adj * dinv[None, :]).astype(dtype)


def glorot(key, shape):
    fan_in, fan_out = shape
    limit = jnp.sqrt(6.0 / (fan_in + fan_out))
    return jax.random.uniform(key, shape, jnp.float32, -limit, limit)


# ------------------------------ reference ------------------------------------
def gcn_ref(adj_hat, x, w1, b1, w2, b2):
    h = jnp.maximum(adj_hat @ (x @ w1) + b1, 0.0)
    return adj_hat @ (h @ w2) + b2


if __name__ == "__main__":
    key = jax.random.PRNGKey(0)
    k_x, k_e1, k_e2, k_w1, k_b1, k_w2, k_b2 = jax.random.split(key, 7)

    # Small, module-consistent shapes.
    num_nodes = 16
    num_edges = 32
    in_channels, hidden_channels, out_channels = 4, 32, 8

    x = jax.random.normal(k_x, (num_nodes, in_channels), jnp.float32)
    src = jax.random.randint(k_e1, (num_edges,), 0, num_nodes, jnp.int32)
    dst = jax.random.randint(k_e2, (num_edges,), 0, num_nodes, jnp.int32)
    edge_index = jnp.stack([src, dst], axis=0)

    w1 = glorot(k_w1, (in_channels, hidden_channels))
    b1 = jax.random.normal(k_b1, (1, hidden_channels), jnp.float32) * 0.01
    w2 = glorot(k_w2, (hidden_channels, out_channels))
    b2 = jax.random.normal(k_b2, (1, out_channels), jnp.float32) * 0.01

    out = jax.jit(gcn_forward)(x, edge_index, w1, b1, w2, b2)
    out = jax.block_until_ready(out)

    adj_hat = build_normalized_adjacency(edge_index, num_nodes)   # f32 reference A_hat
    ref = gcn_ref(adj_hat, x, w1, b1, w2, b2)
    assert out.shape == (num_nodes, out_channels)
    # bf16 adjacency/activations/weights -> loosened tolerance vs pure-f32 reference.
    assert jnp.allclose(out, ref, atol=3e-2, rtol=3e-2), "Pallas output mismatch"

    print("KERNEL_OK")
</pallas_src>

<mosaic_0001>
module attributes {stable_mosaic.version = 11 : i64} {
  func.func private @main(%arg0: i32) attributes {dimension_semantics = [#tpu.dimension_semantics<core_parallel>], iteration_bounds = array<i64: 2>, tpu.core_type = #tpu.core_type<sc_scalar_subcore>, window_params = []} {
    return
  }
}

module attributes {stable_mosaic.version = 11 : i64} {
  func.func private @main(%arg0: i32) attributes {dimension_semantics = [#tpu.dimension_semantics<core_parallel>], iteration_bounds = array<i64: 2>, tpu.core_type = #tpu.core_type<sc_scalar_subcore>, window_params = []} {
    return
  }
}

module attributes {stable_mosaic.version = 11 : i64} {
  func.func @_gcn_layer_kernel(%arg0: i32, %arg1: i32, %arg2: memref<128x128xbf16, #tpu.memory_space<vmem>>, %arg3: memref<128x128xbf16, #tpu.memory_space<vmem>>, %arg4: memref<128x128xbf16, #tpu.memory_space<vmem>>, %arg5: memref<1x128xf32, #tpu.memory_space<vmem>>, %arg6: memref<128x128xbf16, #tpu.memory_space<vmem>>, %arg7: memref<128x128xf32, #tpu.memory_space<vmem>>) attributes {dimension_semantics = [#tpu.dimension_semantics<parallel>, #tpu.dimension_semantics<arbitrary>], iteration_bounds = array<i64: 1, 1>, scalar_prefetch = 0 : i64, scratch_operands = 1 : i64, tpu.core_type = #tpu.core_type<tc>, window_params = [{transform_indices = @transform_0, window_bounds = array<i64: 128, 128>}, {pipeline_mode = #tpu.pipeline_mode<synchronous>, transform_indices = @transform_1, window_bounds = array<i64: 128, 128>}, {pipeline_mode = #tpu.pipeline_mode<synchronous>, transform_indices = @transform_2, window_bounds = array<i64: 128, 128>}, {pipeline_mode = #tpu.pipeline_mode<synchronous>, transform_indices = @transform_3, window_bounds = array<i64: 1, 128>}, {transform_indices = @transform_4, window_bounds = array<i64: 128, 128>}]} {
    %c0_i32 = arith.constant 0 : i32
    %0 = arith.cmpi eq, %arg1, %c0_i32 : i32
    %1 = arith.extui %0 : i1 to i32
    %c0_i32_0 = arith.constant 0 : i32
    %2 = arith.cmpi ne, %1, %c0_i32_0 : i32
    scf.if %2 {
      %cst_9 = arith.constant 0.000000e+00 : f32
      %15 = vector.broadcast %cst_9 : f32 to vector<128x128xf32>
      %c0_10 = arith.constant 0 : index
      %c0_11 = arith.constant 0 : index
      %16 = vector.load %arg7[%c0_10, %c0_11] : memref<128x128xf32, #tpu.memory_space<vmem>>, vector<128x128xf32>
      tpu.vector_store %arg7[%c0_10, %c0_11], %15 {strides = array<i32>} : memref<128x128xf32, #tpu.memory_space<vmem>>, vector<128x128xf32>,
    } else {
    }
    %c128_i32 = arith.constant 128 : i32
    %3 = arith.muli %arg1, %c128_i32 : i32
    %4 = tpu.assume_multiple %3, 128 : i32
    %5 = arith.index_cast %4 : i32 to index
    %c0 = arith.constant 0 : index
    %6 = vector.load %arg3[%5, %c0] : memref<128x128xbf16, #tpu.memory_space<vmem>>, vector<128x128xbf16>
    %c0_1 = arith.constant 0 : index
    %c0_2 = arith.constant 0 : index
    %7 = vector.load %arg7[%c0_1, %c0_2] : memref<128x128xf32, #tpu.memory_space<vmem>>, vector<128x128xf32>
    %c0_3 = arith.constant 0 : index
    %c0_4 = arith.constant 0 : index
    %8 = vector.load %arg2[%c0_3, %c0_4] : memref<128x128xbf16, #tpu.memory_space<vmem>>, vector<128x128xbf16>
    %cst = arith.constant dense<0.000000e+00> : vector<128x128xf32>
    %9 = tpu.matmul %8, %6, %cst {dimension_numbers = #tpu.dot_dimension_numbers<[1], [0], [0], [1], [0, 0, 1, 1], [], []>} : vector<128x128xbf16>, vector<128x128xbf16>, vector<128x128xf32> -> vector<128x128xf32>
    %10 = arith.addf %7, %9 : vector<128x128xf32>
    %c0_5 = arith.constant 0 : index
    %c0_6 = arith.constant 0 : index
    %11 = vector.load %arg7[%c0_5, %c0_6] : memref<128x128xf32, #tpu.memory_space<vmem>>, vector<128x128xf32>
    tpu.vector_store %arg7[%c0_5, %c0_6], %10 {strides = array<i32>} : memref<128x128xf32, #tpu.memory_space<vmem>>, vector<128x128xf32>,
    %c0_i32_7 = arith.constant 0 : i32
    %12 = arith.cmpi eq, %arg1, %c0_i32_7 : i32
    %13 = arith.extui %12 : i1 to i32
    %c0_i32_8 = arith.constant 0 : i32
    %14 = arith.cmpi ne, %13, %c0_i32_8 : i32
    scf.if %14 {
      %c0_9 = arith.constant 0 : index
      %c0_10 = arith.constant 0 : index
      %15 = vector.load %arg7[%c0_9, %c0_10] : memref<128x128xf32, #tpu.memory_space<vmem>>, vector<128x128xf32>
      %16 = arith.truncf %15 : vector<128x128xf32> to vector<128x128xbf16>
      %c0_11 = arith.constant 0 : index
      %c0_12 = arith.constant 0 : index
      %17 = vector.load %arg4[%c0_11, %c0_12] : memref<128x128xbf16, #tpu.memory_space<vmem>>, vector<128x128xbf16>
      %cst_13 = arith.constant dense<0.000000e+00> : vector<128x128xf32>
      %18 = tpu.matmul %16, %17, %cst_13 {dimension_numbers = #tpu.dot_dimension_numbers<[1], [0], [0], [1], [0, 0, 1, 1], [], []>} : vector<128x128xbf16>, vector<128x128xbf16>, vector<128x128xf32> -> vector<128x128xf32>
      %c0_14 = arith.constant 0 : index
      %c0_15 = arith.constant 0 : index
      %19 = vector.load %arg5[%c0_14, %c0_15] : memref<1x128xf32, #tpu.memory_space<vmem>>, vector<1x128xf32>
      %20 = vector.broadcast %19 : vector<1x128xf32> to vector<128x128xf32>
      %21 = arith.addf %18, %20 : vector<128x128xf32>
      %cst_16 = arith.constant 0.000000e+00 : f32
      %22 = vector.broadcast %cst_16 : f32 to vector<128x128xf32>
      %23 = arith.maximumf %21, %22 : vector<128x128xf32>
      %24 = arith.truncf %23 : vector<128x128xf32> to vector<128x128xbf16>
      %c0_17 = arith.constant 0 : index
      %c0_18 = arith.constant 0 : index
      %25 = vector.load %arg6[%c0_17, %c0_18] : memref<128x128xbf16, #tpu.memory_space<vmem>>, vector<128x128xbf16>
      tpu.vector_store %arg6[%c0_17, %c0_18], %24 {strides = array<i32>} : memref<128x128xbf16, #tpu.memory_space<vmem>>, vector<128x128xbf16>,
    } else {
    }
    return
  }
  func.func @transform_0(%arg0: i32, %arg1: i32) -> (i32, i32) {
    %c0_i32 = arith.constant 0 : i32
    return %arg0, %arg1 : i32, i32
  }
  func.func @transform_1(%arg0: i32, %arg1: i32) -> (i32, i32) {
    %c0_i32 = arith.constant 0 : i32
    %c0_i32_0 = arith.constant 0 : i32
    %c0_i32_1 = arith.constant 0 : i32
    return %c0_i32, %c0_i32_0 : i32, i32
  }
  func.func @transform_2(%arg0: i32, %arg1: i32) -> (i32, i32) {
    %c0_i32 = arith.constant 0 : i32
    %c0_i32_0 = arith.constant 0 : i32
    %c0_i32_1 = arith.constant 0 : i32
    return %c0_i32, %c0_i32_0 : i32, i32
  }
  func.func @transform_3(%arg0: i32, %arg1: i32) -> (i32, i32) {
    %c0_i32 = arith.constant 0 : i32
    %c0_i32_0 = arith.constant 0 : i32
    %c0_i32_1 = arith.constant 0 : i32
    return %c0_i32, %c0_i32_0 : i32, i32
  }
  func.func @transform_4(%arg0: i32, %arg1: i32) -> (i32, i32) {
    %c0_i32 = arith.constant 0 : i32
    %c0_i32_0 = arith.constant 0 : i32
    return %arg0, %c0_i32 : i32, i32
  }
}

module attributes {stable_mosaic.version = 11 : i64} {
  func.func @_gcn_layer_kernel(%arg0: i32, %arg1: i32, %arg2: memref<128x128xbf16, #tpu.memory_space<vmem>>, %arg3: memref<128x128xbf16, #tpu.memory_space<vmem>>, %arg4: memref<128x128xbf16, #tpu.memory_space<vmem>>, %arg5: memref<1x128xf32, #tpu.memory_space<vmem>>, %arg6: memref<128x128xf32, #tpu.memory_space<vmem>>, %arg7: memref<128x128xf32, #tpu.memory_space<vmem>>) attributes {dimension_semantics = [#tpu.dimension_semantics<parallel>, #tpu.dimension_semantics<arbitrary>], iteration_bounds = array<i64: 1, 1>, scalar_prefetch = 0 : i64, scratch_operands = 1 : i64, tpu.core_type = #tpu.core_type<tc>, window_params = [{transform_indices = @transform_0, window_bounds = array<i64: 128, 128>}, {pipeline_mode = #tpu.pipeline_mode<synchronous>, transform_indices = @transform_1, window_bounds = array<i64: 128, 128>}, {pipeline_mode = #tpu.pipeline_mode<synchronous>, transform_indices = @transform_2, window_bounds = array<i64: 128, 128>}, {pipeline_mode = #tpu.pipeline_mode<synchronous>, transform_indices = @transform_3, window_bounds = array<i64: 1, 128>}, {transform_indices = @transform_4, window_bounds = array<i64: 128, 128>}]} {
    %c0_i32 = arith.constant 0 : i32
    %0 = arith.cmpi eq, %arg1, %c0_i32 : i32
    %1 = arith.extui %0 : i1 to i32
    %c0_i32_0 = arith.constant 0 : i32
    %2 = arith.cmpi ne, %1, %c0_i32_0 : i32
    scf.if %2 {
      %cst_9 = arith.constant 0.000000e+00 : f32
      %15 = vector.broadcast %cst_9 : f32 to vector<128x128xf32>
      %c0_10 = arith.constant 0 : index
      %c0_11 = arith.constant 0 : index
      %16 = vector.load %arg7[%c0_10, %c0_11] : memref<128x128xf32, #tpu.memory_space<vmem>>, vector<128x128xf32>
      tpu.vector_store %arg7[%c0_10, %c0_11], %15 {strides = array<i32>} : memref<128x128xf32, #tpu.memory_space<vmem>>, vector<128x128xf32>,
    } else {
    }
    %c128_i32 = arith.constant 128 : i32
    %3 = arith.muli %arg1, %c128_i32 : i32
    %4 = tpu.assume_multiple %3, 128 : i32
    %5 = arith.index_cast %4 : i32 to index
    %c0 = arith.constant 0 : index
    %6 = vector.load %arg3[%5, %c0] : memref<128x128xbf16, #tpu.memory_space<vmem>>, vector<128x128xbf16>
    %c0_1 = arith.constant 0 : index
    %c0_2 = arith.constant 0 : index
    %7 = vector.load %arg7[%c0_1, %c0_2] : memref<128x128xf32, #tpu.memory_space<vmem>>, vector<128x128xf32>
    %c0_3 = arith.constant 0 : index
    %c0_4 = arith.constant 0 : index
    %8 = vector.load %arg2[%c0_3, %c0_4] : memref<128x128xbf16, #tpu.memory_space<vmem>>, vector<128x128xbf16>
    %cst = arith.constant dense<0.000000e+00> : vector<128x128xf32>
    %9 = tpu.matmul %8, %6, %cst {dimension_numbers = #tpu.dot_dimension_numbers<[1], [0], [0], [1], [0, 0, 1, 1], [], []>} : vector<128x128xbf16>, vector<128x128xbf16>, vector<128x128xf32> -> vector<128x128xf32>
    %10 = arith.addf %7, %9 : vector<128x128xf32>
    %c0_5 = arith.constant 0 : index
    %c0_6 = arith.constant 0 : index
    %11 = vector.load %arg7[%c0_5, %c0_6] : memref<128x128xf32, #tpu.memory_space<vmem>>, vector<128x128xf32>
    tpu.vector_store %arg7[%c0_5, %c0_6], %10 {strides = array<i32>} : memref<128x128xf32, #tpu.memory_space<vmem>>, vector<128x128xf32>,
    %c0_i32_7 = arith.constant 0 : i32
    %12 = arith.cmpi eq, %arg1, %c0_i32_7 : i32
    %13 = arith.extui %12 : i1 to i32
    %c0_i32_8 = arith.constant 0 : i32
    %14 = arith.cmpi ne, %13, %c0_i32_8 : i32
    scf.if %14 {
      %c0_9 = arith.constant 0 : index
      %c0_10 = arith.constant 0 : index
      %15 = vector.load %arg7[%c0_9, %c0_10] : memref<128x128xf32, #tpu.memory_space<vmem>>, vector<128x128xf32>
      %16 = arith.truncf %15 : vector<128x128xf32> to vector<128x128xbf16>
      %c0_11 = arith.constant 0 : index
      %c0_12 = arith.constant 0 : index
      %17 = vector.load %arg4[%c0_11, %c0_12] : memref<128x128xbf16, #tpu.memory_space<vmem>>, vector<128x128xbf16>
      %cst_13 = arith.constant dense<0.000000e+00> : vector<128x128xf32>
      %18 = tpu.matmul %16, %17, %cst_13 {dimension_numbers = #tpu.dot_dimension_numbers<[1], [0], [0], [1], [0, 0, 1, 1], [], []>} : vector<128x128xbf16>, vector<128x128xbf16>, vector<128x128xf32> -> vector<128x128xf32>
      %c0_14 = arith.constant 0 : index
      %c0_15 = arith.constant 0 : index
      %19 = vector.load %arg5[%c0_14, %c0_15] : memref<1x128xf32, #tpu.memory_space<vmem>>, vector<1x128xf32>
      %20 = vector.broadcast %19 : vector<1x128xf32> to vector<128x128xf32>
      %21 = arith.addf %18, %20 : vector<128x128xf32>
      %c0_16 = arith.constant 0 : index
      %c0_17 = arith.constant 0 : index
      %22 = vector.load %arg6[%c0_16, %c0_17] : memref<128x128xf32, #tpu.memory_space<vmem>>, vector<128x128xf32>
      tpu.vector_store %arg6[%c0_16, %c0_17], %21 {strides = array<i32>} : memref<128x128xf32, #tpu.memory_space<vmem>>, vector<128x128xf32>,
    } else {
    }
    return
  }
  func.func @transform_0(%arg0: i32, %arg1: i32) -> (i32, i32) {
    %c0_i32 = arith.constant 0 : i32
    return %arg0, %arg1 : i32, i32
  }
  func.func @transform_1(%arg0: i32, %arg1: i32) -> (i32, i32) {
    %c0_i32 = arith.constant 0 : i32
    %c0_i32_0 = arith.constant 0 : i32
    %c0_i32_1 = arith.constant 0 : i32
    return %c0_i32, %c0_i32_0 : i32, i32
  }
  func.func @transform_2(%arg0: i32, %arg1: i32) -> (i32, i32) {
    %c0_i32 = arith.constant 0 : i32
    %c0_i32_0 = arith.constant 0 : i32
    %c0_i32_1 = arith.constant 0 : i32
    return %c0_i32, %c0_i32_0 : i32, i32
  }
  func.func @transform_3(%arg0: i32, %arg1: i32) -> (i32, i32) {
    %c0_i32 = arith.constant 0 : i32
    %c0_i32_0 = arith.constant 0 : i32
    %c0_i32_1 = arith.constant 0 : i32
    return %c0_i32, %c0_i32_0 : i32, i32
  }
  func.func @transform_4(%arg0: i32, %arg1: i32) -> (i32, i32) {
    %c0_i32 = arith.constant 0 : i32
    %c0_i32_0 = arith.constant 0 : i32
    return %arg0, %c0_i32 : i32, i32
  }
}

</mosaic_0001>

<llo_original>
// kernel: gcn_forward.3
$region0: #{gcn_forward.3}
  #allocation0 [shape = 'u32[]', space=smem, size = 0x4, offset = 0x4, fixed_abs, tag = 'smem constant byte address 0x4 - core index']
  #allocation1 [shape = 'u32[144,128]{1,0:T(1,128)}', space=vmem, size = 0x12000, scoped, tag = 'internal scratch']
  #allocation2 [shape = 'f32[128,128]{1,0:T(8,128)}', space=vmem, size = 0x10000, scoped, tag = 'scratch operand']
  %s0 = inlined_call_operand.vmem [shape: bf16[128,128], index: 0, kind: input, shape index: {}]
  %s1 = inlined_call_operand.vmem [shape: bf16[128,128], index: 1, kind: input, shape index: {}]
  %s2 = inlined_call_operand.vmem [shape: bf16[128,128], index: 2, kind: input, shape index: {}]
  %s3 = inlined_call_operand.vmem [shape: f32[1,128], index: 3, kind: input, shape index: {}]
  %s4 = inlined_call_operand.vmem [shape: f32[128,128], index: 4, kind: output, shape index: {}]
  %s5 = sld [smem:[#allocation0]]
  $region34: #{gcn_forward.3} parent=0
    _
  %s7 = ssub.s32 1, %s5
  %s8 = scalar_select 0, %s7, %s5
  // Predicated region
  $region2: #{gcn_forward.3} parent=0 // pred_check
    _
  $region3: #{gcn_forward.3} parent=0 // pred_check_branch
    %10 = sbr.rel (0) target = $region5
  $region4: #{gcn_forward.3} parent=0 // pred_region
    _
  $region5: #{gcn_forward.3} parent=0 // pred_fallthru
    _
  // Predicated region
  $region6: #{gcn_forward.3} parent=0 // pred_check
    _
  $region7: #{gcn_forward.3} parent=0 // pred_check_branch
    %12 = sbr.rel (0) target = $region9
  $region8: #{gcn_forward.3} parent=0 // pred_region
    _
  $region9: #{gcn_forward.3} parent=0 // pred_fallthru
    _
  // Predicated region
  $region10: #{gcn_forward.3} parent=0 // pred_check
    _
  $region11: #{gcn_forward.3} parent=0 // pred_check_branch
    %14 = sbr.rel (0) target = $region13
  $region12: #{gcn_forward.3} parent=0 // pred_region
    _
  $region13: #{gcn_forward.3} parent=0 // pred_fallthru
    _
  // Predicated region
  $region14: #{gcn_forward.3} parent=0 // pred_check
    _
  $region15: #{gcn_forward.3} parent=0 // pred_check_branch
    %16 = sbr.rel (0) target = $region17
  $region16: #{gcn_forward.3} parent=0 // pred_region
    _
  $region17: #{gcn_forward.3} parent=0 // pred_fallthru
    _
  %p18 = scmp.eq.s32.totalorder 0, 0
  // Predicated region
  $region18: #{gcn_forward.3} parent=0 // pred_check
    %p19 = pneg %p18
  $region19: #{gcn_forward.3} parent=0 // pred_check_branch
    %21 = sbr.rel (%p19) target = $region21
  $region20: #{gcn_forward.3} parent=0 // pred_region
    %22 = vst [vmem:[#allocation2] sm:$0xff] 0.0
    %23 = vst [vmem:[#allocation2 + $0x8] sm:$0xff] 0.0
    %24 = vst [vmem:[#allocation2 + $0x10] sm:$0xff] 0.0
    %25 = vst [vmem:[#allocation2 + $0x18] sm:$0xff] 0.0
    %26 = vst [vmem:[#allocation2 + $0x20] sm:$0xff] 0.0
    %27 = vst [vmem:[#allocation2 + $0x28] sm:$0xff] 0.0
    %28 = vst [vmem:[#allocation2 + $0x30] sm:$0xff] 0.0
    %29 = vst [vmem:[#allocation2 + $0x38] sm:$0xff] 0.0
    %30 = vst [vmem:[#allocation2 + $0x40] sm:$0xff] 0.0
    %31 = vst [vmem:[#allocation2 + $0x48] sm:$0xff] 0.0
    %32 = vst [vmem:[#allocation2 + $0x50] sm:$0xff] 0.0
    %33 = vst [vmem:[#allocation2 + $0x58] sm:$0xff] 0.0
    %34 = vst [vmem:[#allocation2 + $0x60] sm:$0xff] 0.0
    %35 = vst [vmem:[#allocation2 + $0x68] sm:$0xff] 0.0
    %36 = vst [vmem:[#allocation2 + $0x70] sm:$0xff] 0.0
    %37 = vst [vmem:[#allocation2 + $0x78] sm:$0xff] 0.0
  $region21: #{gcn_forward.3} parent=0 // pred_fallthru
    _
  %s38 = smul.u32 0, 128
  %s39 = sshra.s32 %s38, 3
  %s40 = sand.u32 %s38, 7
  %s41 = smul.addr %s39, 4
  %s42 = scalar_lea.vmem %s1, %s41
  %v43 = vld [vmem:[%s42] sm:$0xf]
  %v44 = vld [vmem:[%s42 + $0x4] sm:$0xf]
  %v45 = vld [vmem:[%s42 + $0x8] sm:$0xf]
  %v46 = vld [vmem:[%s42 + $0xc] sm:$0xf]
  %v47 = vld [vmem:[%s42 + $0x10] sm:$0xf]
  %v48 = vld [vmem:[%s42 + $0x14] sm:$0xf]
  %v49 = vld [vmem:[%s42 + $0x18] sm:$0xf]
  %v50 = vld [vmem:[%s42 + $0x1c] sm:$0xf]
  %v51 = vld [vmem:[%s42 + $0x20] sm:$0xf]
  %v52 = vld [vmem:[%s42 + $0x24] sm:$0xf]
  %v53 = vld [vmem:[%s42 + $0x28] sm:$0xf]
  %v54 = vld [vmem:[%s42 + $0x2c] sm:$0xf]
  %v55 = vld [vmem:[%s42 + $0x30] sm:$0xf]
  %v56 = vld [vmem:[%s42 + $0x34] sm:$0xf]
  %v57 = vld [vmem:[%s42 + $0x38] sm:$0xf]
  %v58 = vld [vmem:[%s42 + $0x3c] sm:$0xf]
  %v59 = vld [vmem:[#allocation2] sm:$0xff]
  %v60 = vld [vmem:[#allocation2 + $0x8] sm:$0xff]
  %v61 = vld [vmem:[#allocation2 + $0x10] sm:$0xff]
  %v62 = vld [vmem:[#allocation2 + $0x18] sm:$0xff]
  %v63 = vld [vmem:[#allocation2 + $0x20] sm:$0xff]
  %v64 = vld [vmem:[#allocation2 + $0x28] sm:$0xff]
  %v65 = vld [vmem:[#allocation2 + $0x30] sm:$0xff]
  %v66 = vld [vmem:[#allocation2 + $0x38] sm:$0xff]
  %v67 = vld [vmem:[#allocation2 + $0x40] sm:$0xff]
  %v68 = vld [vmem:[#allocation2 + $0x48] sm:$0xff]
  %v69 = vld [vmem:[#allocation2 + $0x50] sm:$0xff]
  %v70 = vld [vmem:[#allocation2 + $0x58] sm:$0xff]
  %v71 = vld [vmem:[#allocation2 + $0x60] sm:$0xff]
  %v72 = vld [vmem:[#allocation2 + $0x68] sm:$0xff]
  %v73 = vld [vmem:[#allocation2 + $0x70] sm:$0xff]
  %v74 = vld [vmem:[#allocation2 + $0x78] sm:$0xff]
  %v75 = vld [vmem:[%s0] sm:$0xf]
  %v76 = vld [vmem:[%s0 + $0x4] sm:$0xf]
  %v77 = vld [vmem:[%s0 + $0x8] sm:$0xf]
  %v78 = vld [vmem:[%s0 + $0xc] sm:$0xf]
  %v79 = vld [vmem:[%s0 + $0x10] sm:$0xf]
  %v80 = vld [vmem:[%s0 + $0x14] sm:$0xf]
  %v81 = vld [vmem:[%s0 + $0x18] sm:$0xf]
  %v82 = vld [vmem:[%s0 + $0x1c] sm:$0xf]
  %v83 = vld [vmem:[%s0 + $0x20] sm:$0xf]
  %v84 = vld [vmem:[%s0 + $0x24] sm:$0xf]
  %v85 = vld [vmem:[%s0 + $0x28] sm:$0xf]
  %v86 = vld [vmem:[%s0 + $0x2c] sm:$0xf]
  %v87 = vld [vmem:[%s0 + $0x30] sm:$0xf]
  %v88 = vld [vmem:[%s0 + $0x34] sm:$0xf]
  %v89 = vld [vmem:[%s0 + $0x38] sm:$0xf]
  %v90 = vld [vmem:[%s0 + $0x3c] sm:$0xf]
  %v107 = vunpack.c.l.b16 %v75
  %v108 = vunpack.c.l.b16 %v76
  %v109 = vunpack.c.l.b16 %v77
  %v110 = vunpack.c.l.b16 %v78
  %v111 = vunpack.c.l.b16 %v79
  %v112 = vunpack.c.l.b16 %v80
  %v113 = vunpack.c.l.b16 %v81
  %v114 = vunpack.c.l.b16 %v82
  %v115 = vunpack.c.l.b16 %v83
  %v116 = vunpack.c.l.b16 %v84
  %v117 = vunpack.c.l.b16 %v85
  %v118 = vunpack.c.l.b16 %v86
  %v119 = vunpack.c.l.b16 %v87
  %v120 = vunpack.c.l.b16 %v88
  %v121 = vunpack.c.l.b16 %v89
  %v122 = vunpack.c.l.b16 %v90
  %v123 = vpack.c.b16 %v108, %v107
  %v124 = vpack.c.b16 %v110, %v109
  %v125 = vpack.c.b16 %v112, %v111
  %v126 = vpack.c.b16 %v114, %v113
  %v127 = vpack.c.b16 %v116, %v115
  %v128 = vpack.c.b16 %v118, %v117
  %v129 = vpack.c.b16 %v120, %v119
  %v130 = vpack.c.b16 %v122, %v121
  %v155 = vunpack.c.l.b16 %v43
  %v156 = vunpack.c.l.b16 %v44
  %v157 = vunpack.c.l.b16 %v45
  %v158 = vunpack.c.l.b16 %v46
  %v159 = vunpack.c.l.b16 %v47
  %v160 = vunpack.c.l.b16 %v48
  %v161 = vunpack.c.l.b16 %v49
  %v162 = vunpack.c.l.b16 %v50
  %v163 = vunpack.c.l.b16 %v51
  %v164 = vunpack.c.l.b16 %v52
  %v165 = vunpack.c.l.b16 %v53
  %v166 = vunpack.c.l.b16 %v54
  %v167 = vunpack.c.l.b16 %v55
  %v168 = vunpack.c.l.b16 %v56
  %v169 = vunpack.c.l.b16 %v57
  %v170 = vunpack.c.l.b16 %v58
  %v171 = vpack.c.b16 %v156, %v155
  %v172 = vpack.c.b16 %v158, %v157
  %v173 = vpack.c.b16 %v160, %v159
  %v174 = vpack.c.b16 %v162, %v161
  %v175 = vpack.c.b16 %v164, %v163
  %v176 = vpack.c.b16 %v166, %v165
  %v177 = vpack.c.b16 %v168, %v167
  %v178 = vpack.c.b16 %v170, %v169
  %187 = vmatprep.subr.bf16.mxu0 0
  %188 = vmatpush1.bf16.msra.mxu0 %v178
  %189 = vmatprep.subr.bf16.mxu0 0
  %190 = vmatpush1.bf16.msra.mxu0 %v177
  %191 = vmatprep.subr.bf16.mxu0 0
  %192 = vmatpush1.bf16.msra.mxu0 %v176
  %193 = vmatprep.subr.bf16.mxu0 0
  %194 = vmatpush1.bf16.msra.mxu0 %v175
  %195 = vmatprep.subr.bf16.mxu0 0
  %196 = vmatpush1.bf16.msra.mxu0 %v174
  %197 = vmatprep.subr.bf16.mxu0 0
  %198 = vmatpush1.bf16.msra.mxu0 %v173
  %199 = vmatprep.subr.bf16.mxu0 0
  %200 = vmatpush1.bf16.msra.mxu0 %v172
  %201 = vmatprep.subr.bf16.mxu0 0
  %202 = vmatpush1.bf16.msra.mxu0 %v171
  %203 = vmatprep.subr.bf16.mxu0 0
  %204 = vmatpush2.bf16.msra.mxu0 0
  %205 = vmatprep.subr.bf16.mxu0 0
  %206 = vmatpush2.bf16.msra.mxu0 0
  %207 = vmatprep.subr.bf16.mxu0 0
  %208 = vmatpush2.bf16.msra.mxu0 0
  %209 = vmatprep.subr.bf16.mxu0 0
  %210 = vmatpush2.bf16.msra.mxu0 0
  %211 = vmatprep.subr.bf16.mxu0 0
  %212 = vmatpush2.bf16.msra.mxu0 0
  %213 = vmatprep.subr.bf16.mxu0 0
  %214 = vmatpush2.bf16.msra.mxu0 0
  %215 = vmatprep.subr.bf16.mxu0 0
  %216 = vmatpush2.bf16.msra.mxu0 0
  %217 = vmatprep.subr.bf16.mxu0 0
  %218 = vmatpush2.bf16.msra.mxu0 0
  %219 = vmatprep.mubr.bf16.mxu0 0
  %220 = vmatmul.mubr.bf16.gmra.mxu0 %v123
  %v221 = vpop.f32.mrf.mxu0
  %v222 = vadd.f32 0.0, %v221
  %v223 = vpop.f32.mrf.mxu0
  %v224 = vpop.f32.mrf.mxu0
  %v225 = vadd.f32 0.0, %v224
  %v226 = vpop.f32.mrf.mxu0
  %227 = vmatprep.mubr.bf16.mxu0 0
  %228 = vmatmul.mubr.bf16.gmra.mxu0 %v124
  %v229 = vpop.f32.mrf.mxu0
  %v230 = vadd.f32 0.0, %v229
  %v231 = vpop.f32.mrf.mxu0
  %v232 = vpop.f32.mrf.mxu0
  %v233 = vadd.f32 0.0, %v232
  %v234 = vpop.f32.mrf.mxu0
  %235 = vmatprep.mubr.bf16.mxu0 0
  %236 = vmatmul.mubr.bf16.gmra.mxu0 %v125
  %v237 = vpop.f32.mrf.mxu0
  %v238 = vadd.f32 0.0, %v237
  %v239 = vpop.f32.mrf.mxu0
  %v240 = vpop.f32.mrf.mxu0
  %v241 = vadd.f32 0.0, %v240
  %v242 = vpop.f32.mrf.mxu0
  %243 = vmatprep.mubr.bf16.mxu0 0
  %244 = vmatmul.mubr.bf16.gmra.mxu0 %v126
  %v245 = vpop.f32.mrf.mxu0
  %v246 = vadd.f32 0.0, %v245
  %v247 = vpop.f32.mrf.mxu0
  %v248 = vpop.f32.mrf.mxu0
  %v249 = vadd.f32 0.0, %v248
  %v250 = vpop.f32.mrf.mxu0
  %251 = vmatprep.mubr.bf16.mxu0 0
  %252 = vmatmul.mubr.bf16.gmra.mxu0 %v127
  %v253 = vpop.f32.mrf.mxu0
  %v254 = vadd.f32 0.0, %v253
  %v255 = vpop.f32.mrf.mxu0
  %v256 = vpop.f32.mrf.mxu0
  %v257 = vadd.f32 0.0, %v256
  %v258 = vpop.f32.mrf.mxu0
  %259 = vmatprep.mubr.bf16.mxu0 0
  %260 = vmatmul.mubr.bf16.gmra.mxu0 %v128
  %v261 = vpop.f32.mrf.mxu0
  %v262 = vadd.f32 0.0, %v261
  %v263 = vpop.f32.mrf.mxu0
  %v264 = vpop.f32.mrf.mxu0
  %v265 = vadd.f32 0.0, %v264
  %v266 = vpop.f32.mrf.mxu0
  %267 = vmatprep.mubr.bf16.mxu0 0
  %268 = vmatmul.mubr.bf16.gmra.mxu0 %v129
  %v269 = vpop.f32.mrf.mxu0
  %v270 = vadd.f32 0.0, %v269
  %v271 = vpop.f32.mrf.mxu0
  %v272 = vpop.f32.mrf.mxu0
  %v273 = vadd.f32 0.0, %v272
  %v274 = vpop.f32.mrf.mxu0
  %275 = vmatprep.mubr.bf16.mxu0 0
  %276 = vmatmul.mubr.bf16.gmra.mxu0 %v130
  %v277 = vpop.f32.mrf.mxu0
  %v278 = vadd.f32 0.0, %v277
  %v279 = vpop.f32.mrf.mxu0
  %v280 = vpop.f32.mrf.mxu0
  %v281 = vadd.f32 0.0, %v280
  %v282 = vpop.f32.mrf.mxu0
  %283 = vdwg.mxu0
  %v284 = vadd.f32 %v59, %v222
  %v285 = vadd.f32 %v60, %v225
  %v286 = vadd.f32 %v61, %v230
  %v287 = vadd.f32 %v62, %v233
  %v288 = vadd.f32 %v63, %v238
  %v289 = vadd.f32 %v64, %v241
  %v290 = vadd.f32 %v65, %v246
  %v291 = vadd.f32 %v66, %v249
  %v292 = vadd.f32 %v67, %v254
  %v293 = vadd.f32 %v68, %v257
  %v294 = vadd.f32 %v69, %v262
  %v295 = vadd.f32 %v70, %v265
  %v296 = vadd.f32 %v71, %v270
  %v297 = vadd.f32 %v72, %v273
  %v298 = vadd.f32 %v73, %v278
  %v299 = vadd.f32 %v74, %v281
  %300 = vst [vmem:[#allocation2] sm:$0xff] %v284
  %301 = vst [vmem:[#allocation2 + $0x8] sm:$0xff] %v285
  %302 = vst [vmem:[#allocation2 + $0x10] sm:$0xff] %v286
  %303 = vst [vmem:[#allocation2 + $0x18] sm:$0xff] %v287
  %304 = vst [vmem:[#allocation2 + $0x20] sm:$0xff] %v288
  %305 = vst [vmem:[#allocation2 + $0x28] sm:$0xff] %v289
  %306 = vst [vmem:[#allocation2 + $0x30] sm:$0xff] %v290
  %307 = vst [vmem:[#allocation2 + $0x38] sm:$0xff] %v291
  %308 = vst [vmem:[#allocation2 + $0x40] sm:$0xff] %v292
  %309 = vst [vmem:[#allocation2 + $0x48] sm:$0xff] %v293
  %310 = vst [vmem:[#allocation2 + $0x50] sm:$0xff] %v294
  %311 = vst [vmem:[#allocation2 + $0x58] sm:$0xff] %v295
  %312 = vst [vmem:[#allocation2 + $0x60] sm:$0xff] %v296
  %313 = vst [vmem:[#allocation2 + $0x68] sm:$0xff] %v297
  %314 = vst [vmem:[#allocation2 + $0x70] sm:$0xff] %v298
  %315 = vst [vmem:[#allocation2 + $0x78] sm:$0xff] %v299
  // Predicated region
  $region22: #{gcn_forward.3} parent=0 // pred_check
    %p316 = pneg %p18
  $region23: #{gcn_forward.3} parent=0 // pred_check_branch
    %318 = sbr.rel (%p316) target = $region25
  $region24: #{gcn_forward.3} parent=0 // pred_region
    %v319 = vld [vmem:[#allocation2] sm:$0xff]
    %v320 = vld [vmem:[#allocation2 + $0x8] sm:$0xff]
    %v321 = vld [vmem:[#allocation2 + $0x10] sm:$0xff]
    %v322 = vld [vmem:[#allocation2 + $0x18] sm:$0xff]
    %v323 = vld [vmem:[#allocation2 + $0x20] sm:$0xff]
    %v324 = vld [vmem:[#allocation2 + $0x28] sm:$0xff]
    %v325 = vld [vmem:[#allocation2 + $0x30] sm:$0xff]
    %v326 = vld [vmem:[#allocation2 + $0x38] sm:$0xff]
    %v327 = vld [vmem:[#allocation2 + $0x40] sm:$0xff]
    %v328 = vld [vmem:[#allocation2 + $0x48] sm:$0xff]
    %v329 = vld [vmem:[#allocation2 + $0x50] sm:$0xff]
    %v330 = vld [vmem:[#allocation2 + $0x58] sm:$0xff]
    %v331 = vld [vmem:[#allocation2 + $0x60] sm:$0xff]
    %v332 = vld [vmem:[#allocation2 + $0x68] sm:$0xff]
    %v333 = vld [vmem:[#allocation2 + $0x70] sm:$0xff]
    %v334 = vld [vmem:[#allocation2 + $0x78] sm:$0xff]
    %v335 = vpack.c.bf16 %v320, %v319
    %v336 = vpack.c.bf16 %v322, %v321
    %v337 = vpack.c.bf16 %v324, %v323
    %v338 = vpack.c.bf16 %v326, %v325
    %v339 = vpack.c.bf16 %v328, %v327
    %v340 = vpack.c.bf16 %v330, %v329
    %v341 = vpack.c.bf16 %v332, %v331
    %v342 = vpack.c.bf16 %v334, %v333
    %v343 = vld [vmem:[%s2] sm:$0xf]
    %v344 = vld [vmem:[%s2 + $0x4] sm:$0xf]
    %v345 = vld [vmem:[%s2 + $0x8] sm:$0xf]
    %v346 = vld [vmem:[%s2 + $0xc] sm:$0xf]
    %v347 = vld [vmem:[%s2 + $0x10] sm:$0xf]
    %v348 = vld [vmem:[%s2 + $0x14] sm:$0xf]
    %v349 = vld [vmem:[%s2 + $0x18] sm:$0xf]
    %v350 = vld [vmem:[%s2 + $0x1c] sm:$0xf]
    %v351 = vld [vmem:[%s2 + $0x20] sm:$0xf]
    %v352 = vld [vmem:[%s2 + $0x24] sm:$0xf]
    %v353 = vld [vmem:[%s2 + $0x28] sm:$0xf]
    %v354 = vld [vmem:[%s2 + $0x2c] sm:$0xf]
    %v355 = vld [vmem:[%s2 + $0x30] sm:$0xf]
    %v356 = vld [vmem:[%s2 + $0x34] sm:$0xf]
    %v357 = vld [vmem:[%s2 + $0x38] sm:$0xf]
    %v358 = vld [vmem:[%s2 + $0x3c] sm:$0xf]
    %v359 = vld [vmem:[%s3] sm:$0x1]
    %v361 = vlaneseq
    %v362 = vshrl.u32 %v361, 7
    %v363 = vsub.s32 0, %v362
    %v364 = vrot.slane %v359, %v363
    %v382 = vunpack.c.l.b16 %v343
    %v383 = vunpack.c.l.b16 %v344
    %v384 = vunpack.c.l.b16 %v345
    %v385 = vunpack.c.l.b16 %v346
    %v386 = vunpack.c.l.b16 %v347
    %v387 = vunpack.c.l.b16 %v348
    %v388 = vunpack.c.l.b16 %v349
    %v389 = vunpack.c.l.b16 %v350
    %v390 = vunpack.c.l.b16 %v351
    %v391 = vunpack.c.l.b16 %v352
    %v392 = vunpack.c.l.b16 %v353
    %v393 = vunpack.c.l.b16 %v354
    %v394 = vunpack.c.l.b16 %v355
    %v395 = vunpack.c.l.b16 %v356
    %v396 = vunpack.c.l.b16 %v357
    %v397 = vunpack.c.l.b16 %v358
    %v398 = vpack.c.b16 %v383, %v382
    %v399 = vpack.c.b16 %v385, %v384
    %v400 = vpack.c.b16 %v387, %v386
    %v401 = vpack.c.b16 %v389, %v388
    %v402 = vpack.c.b16 %v391, %v390
    %v403 = vpack.c.b16 %v393, %v392
    %v404 = vpack.c.b16 %v395, %v394
    %v405 = vpack.c.b16 %v397, %v396
    %414 = vmatprep.subr.bf16.mxu0 0
    %415 = vmatpush1.bf16.msra.mxu0 %v405
    %416 = vmatprep.subr.bf16.mxu0 0
    %417 = vmatpush1.bf16.msra.mxu0 %v404
    %418 = vmatprep.subr.bf16.mxu0 0
    %419 = vmatpush1.bf16.msra.mxu0 %v403
    %420 = vmatprep.subr.bf16.mxu0 0
    %421 = vmatpush1.bf16.msra.mxu0 %v402
    %422 = vmatprep.subr.bf16.mxu0 0
    %423 = vmatpush1.bf16.msra.mxu0 %v401
    %424 = vmatprep.subr.bf16.mxu0 0
    %425 = vmatpush1.bf16.msra.mxu0 %v400
    %426 = vmatprep.subr.bf16.mxu0 0
    %427 = vmatpush1.bf16.msra.mxu0 %v399
    %428 = vmatprep.subr.bf16.mxu0 0
    %429 = vmatpush1.bf16.msra.mxu0 %v398
    %430 = vmatprep.subr.bf16.mxu0 0
    %431 = vmatpush2.bf16.msra.mxu0 0
    %432 = vmatprep.subr.bf16.mxu0 0
    %433 = vmatpush2.bf16.msra.mxu0 0
    %434 = vmatprep.subr.bf16.mxu0 0
    %435 = vmatpush2.bf16.msra.mxu0 0
    %436 = vmatprep.subr.bf16.mxu0 0
    %437 = vmatpush2.bf16.msra.mxu0 0
    %438 = vmatprep.subr.bf16.mxu0 0
    %439 = vmatpush2.bf16.msra.mxu0 0
    %440 = vmatprep.subr.bf16.mxu0 0
    %441 = vmatpush2.bf16.msra.mxu0 0
    %442 = vmatprep.subr.bf16.mxu0 0
    %443 = vmatpush2.bf16.msra.mxu0 0
    %444 = vmatprep.subr.bf16.mxu0 0
    %445 = vmatpush2.bf16.msra.mxu0 0
    %446 = vmatprep.mubr.bf16.mxu0 0
    %447 = vmatmul.mubr.bf16.gmra.mxu0 %v335
    %v448 = vpop.f32.mrf.mxu0
    %v449 = vadd.f32 %v364, %v448
    %v450 = vpop.f32.mrf.mxu0
    %v451 = vpop.f32.mrf.mxu0
    %v452 = vadd.f32 %v364, %v451
    %v453 = vpop.f32.mrf.mxu0
    %454 = vmatprep.mubr.bf16.mxu0 0
    %455 = vmatmul.mubr.bf16.gmra.mxu0 %v336
    %v456 = vpop.f32.mrf.mxu0
    %v457 = vadd.f32 %v364, %v456
    %v458 = vpop.f32.mrf.mxu0
    %v459 = vpop.f32.mrf.mxu0
    %v460 = vadd.f32 %v364, %v459
    %v461 = vpop.f32.mrf.mxu0
    %462 = vmatprep.mubr.bf16.mxu0 0
    %463 = vmatmul.mubr.bf16.gmra.mxu0 %v337
    %v464 = vpop.f32.mrf.mxu0
    %v465 = vadd.f32 %v364, %v464
    %v466 = vpop.f32.mrf.mxu0
    %v467 = vpop.f32.mrf.mxu0
    %v468 = vadd.f32 %v364, %v467
    %v469 = vpop.f32.mrf.mxu0
    %470 = vmatprep.mubr.bf16.mxu0 0
    %471 = vmatmul.mubr.bf16.gmra.mxu0 %v338
    %v472 = vpop.f32.mrf.mxu0
    %v473 = vadd.f32 %v364, %v472
    %v474 = vpop.f32.mrf.mxu0
    %v475 = vpop.f32.mrf.mxu0
    %v476 = vadd.f32 %v364, %v475
    %v477 = vpop.f32.mrf.mxu0
    %478 = vmatprep.mubr.bf16.mxu0 0
    %479 = vmatmul.mubr.bf16.gmra.mxu0 %v339
    %v480 = vpop.f32.mrf.mxu0
    %v481 = vadd.f32 %v364, %v480
    %v482 = vpop.f32.mrf.mxu0
    %v483 = vpop.f32.mrf.mxu0
    %v484 = vadd.f32 %v364, %v483
    %v485 = vpop.f32.mrf.mxu0
    %486 = vmatprep.mubr.bf16.mxu0 0
    %487 = vmatmul.mubr.bf16.gmra.mxu0 %v340
    %v488 = vpop.f32.mrf.mxu0
    %v489 = vadd.f32 %v364, %v488
    %v490 = vpop.f32.mrf.mxu0
    %v491 = vpop.f32.mrf.mxu0
    %v492 = vadd.f32 %v364, %v491
    %v493 = vpop.f32.mrf.mxu0
    %494 = vmatprep.mubr.bf16.mxu0 0
    %495 = vmatmul.mubr.bf16.gmra.mxu0 %v341
    %v496 = vpop.f32.mrf.mxu0
    %v497 = vadd.f32 %v364, %v496
    %v498 = vpop.f32.mrf.mxu0
    %v499 = vpop.f32.mrf.mxu0
    %v500 = vadd.f32 %v364, %v499
    %v501 = vpop.f32.mrf.mxu0
    %502 = vmatprep.mubr.bf16.mxu0 0
    %503 = vmatmul.mubr.bf16.gmra.mxu0 %v342
    %v504 = vpop.f32.mrf.mxu0
    %v505 = vadd.f32 %v364, %v504
    %v506 = vpop.f32.mrf.mxu0
    %v507 = vpop.f32.mrf.mxu0
    %v508 = vadd.f32 %v364, %v507
    %v509 = vpop.f32.mrf.mxu0
    %510 = vdwg.mxu0
    %511 = vst [vmem:[%s4] sm:$0xff] %v449
    %512 = vst [vmem:[%s4 + $0x8] sm:$0xff] %v452
    %513 = vst [vmem:[%s4 + $0x10] sm:$0xff] %v457
    %514 = vst [vmem:[%s4 + $0x18] sm:$0xff] %v460
    %515 = vst [vmem:[%s4 + $0x20] sm:$0xff] %v465
    %516 = vst [vmem:[%s4 + $0x28] sm:$0xff] %v468
    %517 = vst [vmem:[%s4 + $0x30] sm:$0xff] %v473
    %518 = vst [vmem:[%s4 + $0x38] sm:$0xff] %v476
    %519 = vst [vmem:[%s4 + $0x40] sm:$0xff] %v481
    %520 = vst [vmem:[%s4 + $0x48] sm:$0xff] %v484
    %521 = vst [vmem:[%s4 + $0x50] sm:$0xff] %v489
    %522 = vst [vmem:[%s4 + $0x58] sm:$0xff] %v492
    %523 = vst [vmem:[%s4 + $0x60] sm:$0xff] %v497
    %524 = vst [vmem:[%s4 + $0x68] sm:$0xff] %v500
    %525 = vst [vmem:[%s4 + $0x70] sm:$0xff] %v505
    %526 = vst [vmem:[%s4 + $0x78] sm:$0xff] %v508
  $region25: #{gcn_forward.3} parent=0 // pred_fallthru
    _
  // Predicated region
  $region26: #{gcn_forward.3} parent=0 // pred_check
    _
  $region27: #{gcn_forward.3} parent=0 // pred_check_branch
    %528 = sbr.rel (0) target = $region29
  $region28: #{gcn_forward.3} parent=0 // pred_region
    _
  $region29: #{gcn_forward.3} parent=0 // pred_fallthru
    _
  // Predicated region
  $region30: #{gcn_forward.3} parent=0 // pred_check
    _
  $region31: #{gcn_forward.3} parent=0 // pred_check_branch
    %530 = sbr.rel (0) target = $region33
  $region32: #{gcn_forward.3} parent=0 // pred_region
    _
  $region33: #{gcn_forward.3} parent=0 // pred_fallthru
    _

// kernel: gcn_forward.2
$region0: #{gcn_forward.2}
  #allocation0 [shape = 'u32[]', space=smem, size = 0x4, offset = 0x4, fixed_abs, tag = 'smem constant byte address 0x4 - core index']
  #allocation1 [shape = 'u32[144,128]{1,0:T(1,128)}', space=vmem, size = 0x12000, scoped, tag = 'internal scratch']
  #allocation2 [shape = 'f32[128,128]{1,0:T(8,128)}', space=vmem, size = 0x10000, scoped, tag = 'scratch operand']
  %s0 = inlined_call_operand.vmem [shape: bf16[128,128], index: 0, kind: input, shape index: {}]
  %s1 = inlined_call_operand.vmem [shape: bf16[128,128], index: 1, kind: input, shape index: {}]
  %s2 = inlined_call_operand.vmem [shape: bf16[128,128], index: 2, kind: input, shape index: {}]
  %s3 = inlined_call_operand.vmem [shape: f32[1,128], index: 3, kind: input, shape index: {}]
  %s4 = inlined_call_operand.vmem [shape: bf16[128,128], index: 4, kind: output, shape index: {}]
  %s5 = sld [smem:[#allocation0]]
  $region34: #{gcn_forward.2} parent=0
    _
  %s7 = ssub.s32 1, %s5
  %s8 = scalar_select 0, %s7, %s5
  // Predicated region
  $region2: #{gcn_forward.2} parent=0 // pred_check
    _
  $region3: #{gcn_forward.2} parent=0 // pred_check_branch
    %10 = sbr.rel (0) target = $region5
  $region4: #{gcn_forward.2} parent=0 // pred_region
    _
  $region5: #{gcn_forward.2} parent=0 // pred_fallthru
    _
  // Predicated region
  $region6: #{gcn_forward.2} parent=0 // pred_check
    _
  $region7: #{gcn_forward.2} parent=0 // pred_check_branch
    %12 = sbr.rel (0) target = $region9
  $region8: #{gcn_forward.2} parent=0 // pred_region
    _
  $region9: #{gcn_forward.2} parent=0 // pred_fallthru
    _
  // Predicated region
  $region10: #{gcn_forward.2} parent=0 // pred_check
    _
  $region11: #{gcn_forward.2} parent=0 // pred_check_branch
    %14 = sbr.rel (0) target = $region13
  $region12: #{gcn_forward.2} parent=0 // pred_region
    _
  $region13: #{gcn_forward.2} parent=0 // pred_fallthru
    _
  // Predicated region
  $region14: #{gcn_forward.2} parent=0 // pred_check
    _
  $region15: #{gcn_forward.2} parent=0 // pred_check_branch
    %16 = sbr.rel (0) target = $region17
  $region16: #{gcn_forward.2} parent=0 // pred_region
    _
  $region17: #{gcn_forward.2} parent=0 // pred_fallthru
    _
  %p18 = scmp.eq.s32.totalorder 0, 0
  // Predicated region
  $region18: #{gcn_forward.2} parent=0 // pred_check
    %p19 = pneg %p18
  $region19: #{gcn_forward.2} parent=0 // pred_check_branch
    %21 = sbr.rel (%p19) target = $region21
  $region20: #{gcn_forward.2} parent=0 // pred_region
    %22 = vst [vmem:[#allocation2] sm:$0xff] 0.0
    %23 = vst [vmem:[#allocation2 + $0x8] sm:$0xff] 0.0
    %24 = vst [vmem:[#allocation2 + $0x10] sm:$0xff] 0.0
    %25 = vst [vmem:[#allocation2 + $0x18] sm:$0xff] 0.0
    %26 = vst [vmem:[#allocation2 + $0x20] sm:$0xff] 0.0
    %27 = vst [vmem:[#allocation2 + $0x28] sm:$0xff] 0.0
    %28 = vst [vmem:[#allocation2 + $0x30] sm:$0xff] 0.0
    %29 = vst [vmem:[#allocation2 + $0x38] sm:$0xff] 0.0
    %30 = vst [vmem:[#allocation2 + $0x40] sm:$0xff] 0.0
    %31 = vst [vmem:[#allocation2 + $0x48] sm:$0xff] 0.0
    %32 = vst [vmem:[#allocation2 + $0x50] sm:$0xff] 0.0
    %33 = vst [vmem:[#allocation2 + $0x58] sm:$0xff] 0.0
    %34 = vst [vmem:[#allocation2 + $0x60] sm:$0xff] 0.0
    %35 = vst [vmem:[#allocation2 + $0x68] sm:$0xff] 0.0
    %36 = vst [vmem:[#allocation2 + $0x70] sm:$0xff] 0.0
    %37 = vst [vmem:[#allocation2 + $0x78] sm:$0xff] 0.0
  $region21: #{gcn_forward.2} parent=0 // pred_fallthru
    _
  %s38 = smul.u32 0, 128
  %s39 = sshra.s32 %s38, 3
  %s40 = sand.u32 %s38, 7
  %s41 = smul.addr %s39, 4
  %s42 = scalar_lea.vmem %s1, %s41
  %v43 = vld [vmem:[%s42] sm:$0xf]
  %v44 = vld [vmem:[%s42 + $0x4] sm:$0xf]
  %v45 = vld [vmem:[%s42 + $0x8] sm:$0xf]
  %v46 = vld [vmem:[%s42 + $0xc] sm:$0xf]
  %v47 = vld [vmem:[%s42 + $0x10] sm:$0xf]
  %v48 = vld [vmem:[%s42 + $0x14] sm:$0xf]
  %v49 = vld [vmem:[%s42 + $0x18] sm:$0xf]
  %v50 = vld [vmem:[%s42 + $0x1c] sm:$0xf]
  %v51 = vld [vmem:[%s42 + $0x20] sm:$0xf]
  %v52 = vld [vmem:[%s42 + $0x24] sm:$0xf]
  %v53 = vld [vmem:[%s42 + $0x28] sm:$0xf]
  %v54 = vld [vmem:[%s42 + $0x2c] sm:$0xf]
  %v55 = vld [vmem:[%s42 + $0x30] sm:$0xf]
  %v56 = vld [vmem:[%s42 + $0x34] sm:$0xf]
  %v57 = vld [vmem:[%s42 + $0x38] sm:$0xf]
  %v58 = vld [vmem:[%s42 + $0x3c] sm:$0xf]
  %v59 = vld [vmem:[#allocation2] sm:$0xff]
  %v60 = vld [vmem:[#allocation2 + $0x8] sm:$0xff]
  %v61 = vld [vmem:[#allocation2 + $0x10] sm:$0xff]
  %v62 = vld [vmem:[#allocation2 + $0x18] sm:$0xff]
  %v63 = vld [vmem:[#allocation2 + $0x20] sm:$0xff]
  %v64 = vld [vmem:[#allocation2 + $0x28] sm:$0xff]
  %v65 = vld [vmem:[#allocation2 + $0x30] sm:$0xff]
  %v66 = vld [vmem:[#allocation2 + $0x38] sm:$0xff]
  %v67 = vld [vmem:[#allocation2 + $0x40] sm:$0xff]
  %v68 = vld [vmem:[#allocation2 + $0x48] sm:$0xff]
  %v69 = vld [vmem:[#allocation2 + $0x50] sm:$0xff]
  %v70 = vld [vmem:[#allocation2 + $0x58] sm:$0xff]
  %v71 = vld [vmem:[#allocation2 + $0x60] sm:$0xff]
  %v72 = vld [vmem:[#allocation2 + $0x68] sm:$0xff]
  %v73 = vld [vmem:[#allocation2 + $0x70] sm:$0xff]
  %v74 = vld [vmem:[#allocation2 + $0x78] sm:$0xff]
  %v75 = vld [vmem:[%s0] sm:$0xf]
  %v76 = vld [vmem:[%s0 + $0x4] sm:$0xf]
  %v77 = vld [vmem:[%s0 + $0x8] sm:$0xf]
  %v78 = vld [vmem:[%s0 + $0xc] sm:$0xf]
  %v79 = vld [vmem:[%s0 + $0x10] sm:$0xf]
  %v80 = vld [vmem:[%s0 + $0x14] sm:$0xf]
  %v81 = vld [vmem:[%s0 + $0x18] sm:$0xf]
  %v82 = vld [vmem:[%s0 + $0x1c] sm:$0xf]
  %v83 = vld [vmem:[%s0 + $0x20] sm:$0xf]
  %v84 = vld [vmem:[%s0 + $0x24] sm:$0xf]
  %v85 = vld [vmem:[%s0 + $0x28] sm:$0xf]
  %v86 = vld [vmem:[%s0 + $0x2c] sm:$0xf]
  %v87 = vld [vmem:[%s0 + $0x30] sm:$0xf]
  %v88 = vld [vmem:[%s0 + $0x34] sm:$0xf]
  %v89 = vld [vmem:[%s0 + $0x38] sm:$0xf]
  %v90 = vld [vmem:[%s0 + $0x3c] sm:$0xf]
  %v107 = vunpack.c.l.b16 %v75
  %v108 = vunpack.c.l.b16 %v76
  %v109 = vunpack.c.l.b16 %v77
  %v110 = vunpack.c.l.b16 %v78
  %v111 = vunpack.c.l.b16 %v79
  %v112 = vunpack.c.l.b16 %v80
  %v113 = vunpack.c.l.b16 %v81
  %v114 = vunpack.c.l.b16 %v82
  %v115 = vunpack.c.l.b16 %v83
  %v116 = vunpack.c.l.b16 %v84
  %v117 = vunpack.c.l.b16 %v85
  %v118 = vunpack.c.l.b16 %v86
  %v119 = vunpack.c.l.b16 %v87
  %v120 = vunpack.c.l.b16 %v88
  %v121 = vunpack.c.l.b16 %v89
  %v122 = vunpack.c.l.b16 %v90
  %v123 = vpack.c.b16 %v108, %v107
  %v124 = vpack.c.b16 %v110, %v109
  %v125 = vpack.c.b16 %v112, %v111
  %v126 = vpack.c.b16 %v114, %v113
  %v127 = vpack.c.b16 %v116, %v115
  %v128 = vpack.c.b16 %v118, %v117
  %v129 = vpack.c.b16 %v120, %v119
  %v130 = vpack.c.b16 %v122, %v121
  %v155 = vunpack.c.l.b16 %v43
  %v156 = vunpack.c.l.b16 %v44
  %v157 = vunpack.c.l.b16 %v45
  %v158 = vunpack.c.l.b16 %v46
  %v159 = vunpack.c.l.b16 %v47
  %v160 = vunpack.c.l.b16 %v48
  %v161 = vunpack.c.l.b16 %v49
  %v162 = vunpack.c.l.b16 %v50
  %v163 = vunpack.c.l.b16 %v51
  %v164 = vunpack.c.l.b16 %v52
  %v165 = vunpack.c.l.b16 %v53
  %v166 = vunpack.c.l.b16 %v54
  %v167 = vunpack.c.l.b16 %v55
  %v168 = vunpack.c.l.b16 %v56
  %v169 = vunpack.c.l.b16 %v57
  %v170 = vunpack.c.l.b16 %v58
  %v171 = vpack.c.b16 %v156, %v155
  %v172 = vpack.c.b16 %v158, %v157
  %v173 = vpack.c.b16 %v160, %v159
  %v174 = vpack.c.b16 %v162, %v161
  %v175 = vpack.c.b16 %v164, %v163
  %v176 = vpack.c.b16 %v166, %v165
  %v177 = vpack.c.b16 %v168, %v167
  %v178 = vpack.c.b16 %v170, %v169
  %187 = vmatprep.subr.bf16.mxu0 0
  %188 = vmatpush1.bf16.msra.mxu0 %v178
  %189 = vmatprep.subr.bf16.mxu0 0
  %190 = vmatpush1.bf16.msra.mxu0 %v177
  %191 = vmatprep.subr.bf16.mxu0 0
  %192 = vmatpush1.bf16.msra.mxu0 %v176
  %193 = vmatprep.subr.bf16.mxu0 0
  %194 = vmatpush1.bf16.msra.mxu0 %v175
  %195 = vmatprep.subr.bf16.mxu0 0
  %196 = vmatpush1.bf16.msra.mxu0 %v174
  %197 = vmatprep.subr.bf16.mxu0 0
  %198 = vmatpush1.bf16.msra.mxu0 %v173
  %199 = vmatprep.subr.bf16.mxu0 0
  %200 = vmatpush1.bf16.msra.mxu0 %v172
  %201 = vmatprep.subr.bf16.mxu0 0
  %202 = vmatpush1.bf16.msra.mxu0 %v171
  %203 = vmatprep.subr.bf16.mxu0 0
  %204 = vmatpush2.bf16.msra.mxu0 0
  %205 = vmatprep.subr.bf16.mxu0 0
  %206 = vmatpush2.bf16.msra.mxu0 0
  %207 = vmatprep.subr.bf16.mxu0 0
  %208 = vmatpush2.bf16.msra.mxu0 0
  %209 = vmatprep.subr.bf16.mxu0 0
  %210 = vmatpush2.bf16.msra.mxu0 0
  %211 = vmatprep.subr.bf16.mxu0 0
  %212 = vmatpush2.bf16.msra.mxu0 0
  %213 = vmatprep.subr.bf16.mxu0 0
  %214 = vmatpush2.bf16.msra.mxu0 0
  %215 = vmatprep.subr.bf16.mxu0 0
  %216 = vmatpush2.bf16.msra.mxu0 0
  %217 = vmatprep.subr.bf16.mxu0 0
  %218 = vmatpush2.bf16.msra.mxu0 0
  %219 = vmatprep.mubr.bf16.mxu0 0
  %220 = vmatmul.mubr.bf16.gmra.mxu0 %v123
  %v221 = vpop.f32.mrf.mxu0
  %v222 = vadd.f32 0.0, %v221
  %v223 = vpop.f32.mrf.mxu0
  %v224 = vpop.f32.mrf.mxu0
  %v225 = vadd.f32 0.0, %v224
  %v226 = vpop.f32.mrf.mxu0
  %227 = vmatprep.mubr.bf16.mxu0 0
  %228 = vmatmul.mubr.bf16.gmra.mxu0 %v124
  %v229 = vpop.f32.mrf.mxu0
  %v230 = vadd.f32 0.0, %v229
  %v231 = vpop.f32.mrf.mxu0
  %v232 = vpop.f32.mrf.mxu0
  %v233 = vadd.f32 0.0, %v232
  %v234 = vpop.f32.mrf.mxu0
  %235 = vmatprep.mubr.bf16.mxu0 0
  %236 = vmatmul.mubr.bf16.gmra.mxu0 %v125
  %v237 = vpop.f32.mrf.mxu0
  %v238 = vadd.f32 0.0, %v237
  %v239 = vpop.f32.mrf.mxu0
  %v240 = vpop.f32.mrf.mxu0
  %v241 = vadd.f32 0.0, %v240
  %v242 = vpop.f32.mrf.mxu0
  %243 = vmatprep.mubr.bf16.mxu0 0
  %244 = vmatmul.mubr.bf16.gmra.mxu0 %v126
  %v245 = vpop.f32.mrf.mxu0
  %v246 = vadd.f32 0.0, %v245
  %v247 = vpop.f32.mrf.mxu0
  %v248 = vpop.f32.mrf.mxu0
  %v249 = vadd.f32 0.0, %v248
  %v250 = vpop.f32.mrf.mxu0
  %251 = vmatprep.mubr.bf16.mxu0 0
  %252 = vmatmul.mubr.bf16.gmra.mxu0 %v127
  %v253 = vpop.f32.mrf.mxu0
  %v254 = vadd.f32 0.0, %v253
  %v255 = vpop.f32.mrf.mxu0
  %v256 = vpop.f32.mrf.mxu0
  %v257 = vadd.f32 0.0, %v256
  %v258 = vpop.f32.mrf.mxu0
  %259 = vmatprep.mubr.bf16.mxu0 0
  %260 = vmatmul.mubr.bf16.gmra.mxu0 %v128
  %v261 = vpop.f32.mrf.mxu0
  %v262 = vadd.f32 0.0, %v261
  %v263 = vpop.f32.mrf.mxu0
  %v264 = vpop.f32.mrf.mxu0
  %v265 = vadd.f32 0.0, %v264
  %v266 = vpop.f32.mrf.mxu0
  %267 = vmatprep.mubr.bf16.mxu0 0
  %268 = vmatmul.mubr.bf16.gmra.mxu0 %v129
  %v269 = vpop.f32.mrf.mxu0
  %v270 = vadd.f32 0.0, %v269
  %v271 = vpop.f32.mrf.mxu0
  %v272 = vpop.f32.mrf.mxu0
  %v273 = vadd.f32 0.0, %v272
  %v274 = vpop.f32.mrf.mxu0
  %275 = vmatprep.mubr.bf16.mxu0 0
  %276 = vmatmul.mubr.bf16.gmra.mxu0 %v130
  %v277 = vpop.f32.mrf.mxu0
  %v278 = vadd.f32 0.0, %v277
  %v279 = vpop.f32.mrf.mxu0
  %v280 = vpop.f32.mrf.mxu0
  %v281 = vadd.f32 0.0, %v280
  %v282 = vpop.f32.mrf.mxu0
  %283 = vdwg.mxu0
  %v284 = vadd.f32 %v59, %v222
  %v285 = vadd.f32 %v60, %v225
  %v286 = vadd.f32 %v61, %v230
  %v287 = vadd.f32 %v62, %v233
  %v288 = vadd.f32 %v63, %v238
  %v289 = vadd.f32 %v64, %v241
  %v290 = vadd.f32 %v65, %v246
  %v291 = vadd.f32 %v66, %v249
  %v292 = vadd.f32 %v67, %v254
  %v293 = vadd.f32 %v68, %v257
  %v294 = vadd.f32 %v69, %v262
  %v295 = vadd.f32 %v70, %v265
  %v296 = vadd.f32 %v71, %v270
  %v297 = vadd.f32 %v72, %v273
  %v298 = vadd.f32 %v73, %v278
  %v299 = vadd.f32 %v74, %v281
  %300 = vst [vmem:[#allocation2] sm:$0xff] %v284
  %301 = vst [vmem:[#allocation2 + $0x8] sm:$0xff] %v285
  %302 = vst [vmem:[#allocation2 + $0x10] sm:$0xff] %v286
  %303 = vst [vmem:[#allocation2 + $0x18] sm:$0xff] %v287
  %304 = vst [vmem:[#allocation2 + $0x20] sm:$0xff] %v288
  %305 = vst [vmem:[#allocation2 + $0x28] sm:$0xff] %v289
  %306 = vst [vmem:[#allocation2 + $0x30] sm:$0xff] %v290
  %307 = vst [vmem:[#allocation2 + $0x38] sm:$0xff] %v291
  %308 = vst [vmem:[#allocation2 + $0x40] sm:$0xff] %v292
  %309 = vst [vmem:[#allocation2 + $0x48] sm:$0xff] %v293
  %310 = vst [vmem:[#allocation2 + $0x50] sm:$0xff] %v294
  %311 = vst [vmem:[#allocation2 + $0x58] sm:$0xff] %v295
  %312 = vst [vmem:[#allocation2 + $0x60] sm:$0xff] %v296
  %313 = vst [vmem:[#allocation2 + $0x68] sm:$0xff] %v297
  %314 = vst [vmem:[#allocation2 + $0x70] sm:$0xff] %v298
  %315 = vst [vmem:[#allocation2 + $0x78] sm:$0xff] %v299
  // Predicated region
  $region22: #{gcn_forward.2} parent=0 // pred_check
    %p316 = pneg %p18
  $region23: #{gcn_forward.2} parent=0 // pred_check_branch
    %318 = sbr.rel (%p316) target = $region25
  $region24: #{gcn_forward.2} parent=0 // pred_region
    %v319 = vld [vmem:[#allocation2] sm:$0xff]
    %v320 = vld [vmem:[#allocation2 + $0x8] sm:$0xff]
    %v321 = vld [vmem:[#allocation2 + $0x10] sm:$0xff]
    %v322 = vld [vmem:[#allocation2 + $0x18] sm:$0xff]
    %v323 = vld [vmem:[#allocation2 + $0x20] sm:$0xff]
    %v324 = vld [vmem:[#allocation2 + $0x28] sm:$0xff]
    %v325 = vld [vmem:[#allocation2 + $0x30] sm:$0xff]
    %v326 = vld [vmem:[#allocation2 + $0x38] sm:$0xff]
    %v327 = vld [vmem:[#allocation2 + $0x40] sm:$0xff]
    %v328 = vld [vmem:[#allocation2 + $0x48] sm:$0xff]
    %v329 = vld [vmem:[#allocation2 + $0x50] sm:$0xff]
    %v330 = vld [vmem:[#allocation2 + $0x58] sm:$0xff]
    %v331 = vld [vmem:[#allocation2 + $0x60] sm:$0xff]
    %v332 = vld [vmem:[#allocation2 + $0x68] sm:$0xff]
    %v333 = vld [vmem:[#allocation2 + $0x70] sm:$0xff]
    %v334 = vld [vmem:[#allocation2 + $0x78] sm:$0xff]
    %v335 = vpack.c.bf16 %v320, %v319
    %v336 = vpack.c.bf16 %v322, %v321
    %v337 = vpack.c.bf16 %v324, %v323
    %v338 = vpack.c.bf16 %v326, %v325
    %v339 = vpack.c.bf16 %v328, %v327
    %v340 = vpack.c.bf16 %v330, %v329
    %v341 = vpack.c.bf16 %v332, %v331
    %v342 = vpack.c.bf16 %v334, %v333
    %v343 = vld [vmem:[%s2] sm:$0xf]
    %v344 = vld [vmem:[%s2 + $0x4] sm:$0xf]
    %v345 = vld [vmem:[%s2 + $0x8] sm:$0xf]
    %v346 = vld [vmem:[%s2 + $0xc] sm:$0xf]
    %v347 = vld [vmem:[%s2 + $0x10] sm:$0xf]
    %v348 = vld [vmem:[%s2 + $0x14] sm:$0xf]
    %v349 = vld [vmem:[%s2 + $0x18] sm:$0xf]
    %v350 = vld [vmem:[%s2 + $0x1c] sm:$0xf]
    %v351 = vld [vmem:[%s2 + $0x20] sm:$0xf]
    %v352 = vld [vmem:[%s2 + $0x24] sm:$0xf]
    %v353 = vld [vmem:[%s2 + $0x28] sm:$0xf]
    %v354 = vld [vmem:[%s2 + $0x2c] sm:$0xf]
    %v355 = vld [vmem:[%s2 + $0x30] sm:$0xf]
    %v356 = vld [vmem:[%s2 + $0x34] sm:$0xf]
    %v357 = vld [vmem:[%s2 + $0x38] sm:$0xf]
    %v358 = vld [vmem:[%s2 + $0x3c] sm:$0xf]
    %v359 = vld [vmem:[%s3] sm:$0x1]
    %v361 = vlaneseq
    %v362 = vshrl.u32 %v361, 7
    %v363 = vsub.s32 0, %v362
    %v364 = vrot.slane %v359, %v363
    %v382 = vunpack.c.l.b16 %v343
    %v383 = vunpack.c.l.b16 %v344
    %v384 = vunpack.c.l.b16 %v345
    %v385 = vunpack.c.l.b16 %v346
    %v386 = vunpack.c.l.b16 %v347
    %v387 = vunpack.c.l.b16 %v348
    %v388 = vunpack.c.l.b16 %v349
    %v389 = vunpack.c.l.b16 %v350
    %v390 = vunpack.c.l.b16 %v351
    %v391 = vunpack.c.l.b16 %v352
    %v392 = vunpack.c.l.b16 %v353
    %v393 = vunpack.c.l.b16 %v354
    %v394 = vunpack.c.l.b16 %v355
    %v395 = vunpack.c.l.b16 %v356
    %v396 = vunpack.c.l.b16 %v357
    %v397 = vunpack.c.l.b16 %v358
    %v398 = vpack.c.b16 %v383, %v382
    %v399 = vpack.c.b16 %v385, %v384
    %v400 = vpack.c.b16 %v387, %v386
    %v401 = vpack.c.b16 %v389, %v388
    %v402 = vpack.c.b16 %v391, %v390
    %v403 = vpack.c.b16 %v393, %v392
    %v404 = vpack.c.b16 %v395, %v394
    %v405 = vpack.c.b16 %v397, %v396
    %414 = vmatprep.subr.bf16.mxu0 0
    %415 = vmatpush1.bf16.msra.mxu0 %v405
    %416 = vmatprep.subr.bf16.mxu0 0
    %417 = vmatpush1.bf16.msra.mxu0 %v404
    %418 = vmatprep.subr.bf16.mxu0 0
    %419 = vmatpush1.bf16.msra.mxu0 %v403
    %420 = vmatprep.subr.bf16.mxu0 0
    %421 = vmatpush1.bf16.msra.mxu0 %v402
    %422 = vmatprep.subr.bf16.mxu0 0
    %423 = vmatpush1.bf16.msra.mxu0 %v401
    %424 = vmatprep.subr.bf16.mxu0 0
    %425 = vmatpush1.bf16.msra.mxu0 %v400
    %426 = vmatprep.subr.bf16.mxu0 0
    %427 = vmatpush1.bf16.msra.mxu0 %v399
    %428 = vmatprep.subr.bf16.mxu0 0
    %429 = vmatpush1.bf16.msra.mxu0 %v398
    %430 = vmatprep.subr.bf16.mxu0 0
    %431 = vmatpush2.bf16.msra.mxu0 0
    %432 = vmatprep.subr.bf16.mxu0 0
    %433 = vmatpush2.bf16.msra.mxu0 0
    %434 = vmatprep.subr.bf16.mxu0 0
    %435 = vmatpush2.bf16.msra.mxu0 0
    %436 = vmatprep.subr.bf16.mxu0 0
    %437 = vmatpush2.bf16.msra.mxu0 0
    %438 = vmatprep.subr.bf16.mxu0 0
    %439 = vmatpush2.bf16.msra.mxu0 0
    %440 = vmatprep.subr.bf16.mxu0 0
    %441 = vmatpush2.bf16.msra.mxu0 0
    %442 = vmatprep.subr.bf16.mxu0 0
    %443 = vmatpush2.bf16.msra.mxu0 0
    %444 = vmatprep.subr.bf16.mxu0 0
    %445 = vmatpush2.bf16.msra.mxu0 0
    %446 = vmatprep.mubr.bf16.mxu0 0
    %447 = vmatmul.mubr.bf16.gmra.mxu0 %v335
    %v448 = vpop.f32.mrf.mxu0
    %v449 = vadd.f32 %v364, %v448
    %v450 = vpop.f32.mrf.mxu0
    %v451 = vpop.f32.mrf.mxu0
    %v452 = vadd.f32 %v364, %v451
    %v453 = vpop.f32.mrf.mxu0
    %454 = vmatprep.mubr.bf16.mxu0 0
    %455 = vmatmul.mubr.bf16.gmra.mxu0 %v336
    %v456 = vpop.f32.mrf.mxu0
    %v457 = vadd.f32 %v364, %v456
    %v458 = vpop.f32.mrf.mxu0
    %v459 = vpop.f32.mrf.mxu0
    %v460 = vadd.f32 %v364, %v459
    %v461 = vpop.f32.mrf.mxu0
    %462 = vmatprep.mubr.bf16.mxu0 0
    %463 = vmatmul.mubr.bf16.gmra.mxu0 %v337
    %v464 = vpop.f32.mrf.mxu0
    %v465 = vadd.f32 %v364, %v464
    %v466 = vpop.f32.mrf.mxu0
    %v467 = vpop.f32.mrf.mxu0
    %v468 = vadd.f32 %v364, %v467
    %v469 = vpop.f32.mrf.mxu0
    %470 = vmatprep.mubr.bf16.mxu0 0
    %471 = vmatmul.mubr.bf16.gmra.mxu0 %v338
    %v472 = vpop.f32.mrf.mxu0
    %v473 = vadd.f32 %v364, %v472
    %v474 = vpop.f32.mrf.mxu0
    %v475 = vpop.f32.mrf.mxu0
    %v476 = vadd.f32 %v364, %v475
    %v477 = vpop.f32.mrf.mxu0
    %478 = vmatprep.mubr.bf16.mxu0 0
    %479 = vmatmul.mubr.bf16.gmra.mxu0 %v339
    %v480 = vpop.f32.mrf.mxu0
    %v481 = vadd.f32 %v364, %v480
    %v482 = vpop.f32.mrf.mxu0
    %v483 = vpop.f32.mrf.mxu0
    %v484 = vadd.f32 %v364, %v483
    %v485 = vpop.f32.mrf.mxu0
    %486 = vmatprep.mubr.bf16.mxu0 0
    %487 = vmatmul.mubr.bf16.gmra.mxu0 %v340
    %v488 = vpop.f32.mrf.mxu0
    %v489 = vadd.f32 %v364, %v488
    %v490 = vpop.f32.mrf.mxu0
    %v491 = vpop.f32.mrf.mxu0
    %v492 = vadd.f32 %v364, %v491
    %v493 = vpop.f32.mrf.mxu0
    %494 = vmatprep.mubr.bf16.mxu0 0
    %495 = vmatmul.mubr.bf16.gmra.mxu0 %v341
    %v496 = vpop.f32.mrf.mxu0
    %v497 = vadd.f32 %v364, %v496
    %v498 = vpop.f32.mrf.mxu0
    %v499 = vpop.f32.mrf.mxu0
    %v500 = vadd.f32 %v364, %v499
    %v501 = vpop.f32.mrf.mxu0
    %502 = vmatprep.mubr.bf16.mxu0 0
    %503 = vmatmul.mubr.bf16.gmra.mxu0 %v342
    %v504 = vpop.f32.mrf.mxu0
    %v505 = vadd.f32 %v364, %v504
    %v506 = vpop.f32.mrf.mxu0
    %v507 = vpop.f32.mrf.mxu0
    %v508 = vadd.f32 %v364, %v507
    %v509 = vpop.f32.mrf.mxu0
    %510 = vdwg.mxu0
    %v511 = vmax.f32 %v449, 0.0
    %v512 = vmax.f32 %v452, 0.0
    %v513 = vmax.f32 %v457, 0.0
    %v514 = vmax.f32 %v460, 0.0
    %v515 = vmax.f32 %v465, 0.0
    %v516 = vmax.f32 %v468, 0.0
    %v517 = vmax.f32 %v473, 0.0
    %v518 = vmax.f32 %v476, 0.0
    %v519 = vmax.f32 %v481, 0.0
    %v520 = vmax.f32 %v484, 0.0
    %v521 = vmax.f32 %v489, 0.0
    %v522 = vmax.f32 %v492, 0.0
    %v523 = vmax.f32 %v497, 0.0
    %v524 = vmax.f32 %v500, 0.0
    %v525 = vmax.f32 %v505, 0.0
    %v526 = vmax.f32 %v508, 0.0
    %v527 = vpack.c.bf16 %v512, %v511
    %v528 = vpack.c.bf16 %v514, %v513
    %v529 = vpack.c.bf16 %v516, %v515
    %v530 = vpack.c.bf16 %v518, %v517
    %v531 = vpack.c.bf16 %v520, %v519
    %v532 = vpack.c.bf16 %v522, %v521
    %v533 = vpack.c.bf16 %v524, %v523
    %v534 = vpack.c.bf16 %v526, %v525
    %v543 = vunpack.c.l.b16 %v527
    %v544 = vunpack.c.h.b16 %v527
    %v545 = vunpack.c.l.b16 %v528
    %v546 = vunpack.c.h.b16 %v528
    %v547 = vunpack.c.l.b16 %v529
    %v548 = vunpack.c.h.b16 %v529
    %v549 = vunpack.c.l.b16 %v530
    %v550 = vunpack.c.h.b16 %v530
    %v551 = vunpack.c.l.b16 %v531
    %v552 = vunpack.c.h.b16 %v531
    %v553 = vunpack.c.l.b16 %v532
    %v554 = vunpack.c.h.b16 %v532
    %v555 = vunpack.c.l.b16 %v533
    %v556 = vunpack.c.h.b16 %v533
    %v557 = vunpack.c.l.b16 %v534
    %v558 = vunpack.c.h.b16 %v534
    %v559 = vpack.c.b16 %v543, %v543
    %v560 = vpack.c.b16 %v544, %v544
    %v561 = vpack.c.b16 %v545, %v545
    %v562 = vpack.c.b16 %v546, %v546
    %v563 = vpack.c.b16 %v547, %v547
    %v564 = vpack.c.b16 %v548, %v548
    %v565 = vpack.c.b16 %v549, %v549
    %v566 = vpack.c.b16 %v550, %v550
    %v567 = vpack.c.b16 %v551, %v551
    %v568 = vpack.c.b16 %v552, %v552
    %v569 = vpack.c.b16 %v553, %v553
    %v570 = vpack.c.b16 %v554, %v554
    %v571 = vpack.c.b16 %v555, %v555
    %v572 = vpack.c.b16 %v556, %v556
    %v573 = vpack.c.b16 %v557, %v557
    %v574 = vpack.c.b16 %v558, %v558
    %591 = vst [vmem:[%s4] sm:$0xf] %v559
    %592 = vst [vmem:[%s4 + $0x4] sm:$0xf] %v560
    %593 = vst [vmem:[%s4 + $0x8] sm:$0xf] %v561
    %594 = vst [vmem:[%s4 + $0xc] sm:$0xf] %v562
    %595 = vst [vmem:[%s4 + $0x10] sm:$0xf] %v563
    %596 = vst [vmem:[%s4 + $0x14] sm:$0xf] %v564
    %597 = vst [vmem:[%s4 + $0x18] sm:$0xf] %v565
    %598 = vst [vmem:[%s4 + $0x1c] sm:$0xf] %v566
    %599 = vst [vmem:[%s4 + $0x20] sm:$0xf] %v567
    %600 = vst [vmem:[%s4 + $0x24] sm:$0xf] %v568
    %601 = vst [vmem:[%s4 + $0x28] sm:$0xf] %v569
    %602 = vst [vmem:[%s4 + $0x2c] sm:$0xf] %v570
    %603 = vst [vmem:[%s4 + $0x30] sm:$0xf] %v571
    %604 = vst [vmem:[%s4 + $0x34] sm:$0xf] %v572
    %605 = vst [vmem:[%s4 + $0x38] sm:$0xf] %v573
    %606 = vst [vmem:[%s4 + $0x3c] sm:$0xf] %v574
  $region25: #{gcn_forward.2} parent=0 // pred_fallthru
    _
  // Predicated region
  $region26: #{gcn_forward.2} parent=0 // pred_check
    _
  $region27: #{gcn_forward.2} parent=0 // pred_check_branch
    %608 = sbr.rel (0) target = $region29
  $region28: #{gcn_forward.2} parent=0 // pred_region
    _
  $region29: #{gcn_forward.2} parent=0 // pred_fallthru
    _
  // Predicated region
  $region30: #{gcn_forward.2} parent=0 // pred_check
    _
  $region31: #{gcn_forward.2} parent=0 // pred_check_branch
    %610 = sbr.rel (0) target = $region33
  $region32: #{gcn_forward.2} parent=0 // pred_region
    _
  $region33: #{gcn_forward.2} parent=0 // pred_fallthru
    _

</llo_original>
